<compile_context>
chip_gen: v7x
topology: tpu7x:2x2x1
jax: 0.10.0
libtpu: 0.0.40
codegen_flags: <defaults>
</compile_context>

<pallas_src>
import jax
import jax.numpy as jnp
from jax.experimental import pallas as pl
from jax.experimental.pallas import tpu as pltpu

INPUT_SIZE = 28
HIDDEN_SIZE = 128
OUTPUT_SIZE = 28
_SUBLANE = 8  # f32 sublane tile height


def _rnn_kernel(x_ref, w_ih_ref, b_comb_ref, w_hh_ref, w_ho_ref, b_ho_ref,
                out_ref):
    # x_ref: (T*Bp, D_in) f32, time-major (row t*Bp + b is x[b, t, :]).
    # w_hh_ref: (H, H) bf16 (pre-cast at init).  Everything else f32.
    TBp = x_ref.shape[0]
    Bp = out_ref.shape[0]
    T = TBp // Bp

    # Hoisted input projection + combined bias: one batched MXU pass covering
    # every time step, off the serial critical path.  Kept f32 (cheap 28-deep
    # contraction; keeps recurrence inputs accurate).
    ih_all = (jnp.dot(x_ref[...], w_ih_ref[...],
                      preferred_element_type=jnp.float32)
              + b_comb_ref[...])                              # (T*Bp, H) f32

    w_hh = w_hh_ref[...]                                      # (H, H) bf16, loaded once
    # TODO(synk): if the bundle dump shows Mosaic re-pushing this 128x128 RHS
    # into the systolic array every step, make W_hh weight-stationary with
    # pltpu.matmul_push_rhs before the loop + matmul_acc_lhs/matmul_pop per
    # step (especially cheap on v7x's addressed MRB).

    # t = 0: h_0 == 0, so h @ W_hh contributes nothing (b_hh is in b_comb).
    h = jnp.tanh(ih_all[0:Bp, :])                             # (Bp, H) f32

    # Serial recurrence, statically unrolled (T small & static): one bf16
    # (Bp,H)x(H,H) MXU matmul (f32 accumulate) + one f32 tanh per step.
    # Slices start at multiples of Bp=8 -> (8,128)-tile aligned, no XLU work.
    # TODO(synk): if T grows beyond a few tens of steps, switch to
    # lax.fori_loop over a (T, Bp, H) buffer indexed with pl.ds(t*Bp, Bp).
    for t in range(1, T):
        hh = jnp.dot(h.astype(jnp.bfloat16), w_hh,
                     preferred_element_type=jnp.float32)
        h = jnp.tanh(ih_all[t * Bp:(t + 1) * Bp, :] + hh)

    # Output projection kept f32 (single tiny matmul, off the serial chain).
    # TODO(synk): if D_out grows, lane-pad w_ho/b_ho to a multiple of 128 so
    # the final store is an unmasked vst (here (8,28) is negligible).
    out_ref[...] = (jnp.dot(h, w_ho_ref[...],
                            preferred_element_type=jnp.float32)
                    + b_ho_ref[...]).astype(out_ref.dtype)


def prepare_params(w_ih, b_ih, w_hh, b_hh, w_ho, b_ho):
    """One-time init-side prep: fold recurrence biases, pre-cast W_hh to bf16.
    Weights already pre-transposed: w_ih (D_in,H), w_hh (H,H), w_ho (H,D_out);
    biases (1,H)/(1,D_out)."""
    return dict(
        w_ih=w_ih.astype(jnp.float32),
        b_comb=(b_ih + b_hh).astype(jnp.float32),
        w_hh_bf16=w_hh.astype(jnp.bfloat16),
        w_ho=w_ho.astype(jnp.float32),
        b_ho=b_ho.astype(jnp.float32),
    )


@jax.jit
def simple_rnn_forward(x, params):
    """x: (B, T, D_in) f32.  Returns (B, D_out) f32."""
    B, T, D_in = x.shape
    D_out = params["w_ho"].shape[1]

    # Pad batch to a multiple of the f32 sublane tile (8) so every per-step
    # slice inside the kernel is (8,128)-tile aligned.
    Bp = max(_SUBLANE, ((B + _SUBLANE - 1) // _SUBLANE) * _SUBLANE)
    if Bp != B:
        xp = jnp.zeros((Bp, T, D_in), x.dtype).at[:B].set(x)
    else:
        xp = x

    # Wrapper-side layout plumbing (fused into the same jit as the kernel):
    # time-major flat slab for the batched input projection.
    x_tb = jnp.transpose(xp, (1, 0, 2)).reshape(T * Bp, D_in)

    vmem = pl.BlockSpec(memory_space=pltpu.MemorySpace.VMEM)

    # Single invocation: no grid, all operands whole-array resident in VMEM.
    # TODO(synk): if batch grows (v7x has 2 TensorCores), add a leading batch
    # grid axis with dimension_semantics=("parallel",); at B=2 the kernel is
    # latency-bound and grid steps would be pure overhead.
    out_p = pl.pallas_call(
        _rnn_kernel,
        out_shape=jax.ShapeDtypeStruct((Bp, D_out), jnp.float32),
        in_specs=[vmem] * 6,
        out_specs=vmem,
    )(x_tb, params["w_ih"], params["b_comb"], params["w_hh_bf16"],
      params["w_ho"], params["b_ho"])

    # Drop padded rows so they never leak to the caller.
    return out_p[:B]


def _reference(x, w_ih, b_ih, w_hh, b_hh, w_ho, b_ho):
    B, T, _ = x.shape
    h = jnp.zeros((B, w_ih.shape[1]), jnp.float32)
    for t in range(T):
        h = jnp.tanh(x[:, t, :] @ w_ih + b_ih + h @ w_hh + b_hh)
    return h @ w_ho + b_ho


if __name__ == "__main__":
    key = jax.random.PRNGKey(0)
    k = jax.random.split(key, 7)

    B, T = 2, 8
    x = jax.random.normal(k[0], (B, T, INPUT_SIZE), jnp.float32)

    # Deterministic parameter init (nn.Linear-style uniform fan-in bound).
    def lin(kw, kb, fan_in, fan_out):
        bound = 1.0 / jnp.sqrt(fan_in)
        w = jax.random.uniform(kw, (fan_in, fan_out), jnp.float32, -bound, bound)
        b = jax.random.uniform(kb, (1, fan_out), jnp.float32, -bound, bound)
        return w, b

    w_ih, b_ih = lin(k[1], k[2], INPUT_SIZE, HIDDEN_SIZE)
    w_hh, b_hh = lin(k[3], k[4], HIDDEN_SIZE, HIDDEN_SIZE)
    w_ho, b_ho = lin(k[5], k[6], HIDDEN_SIZE, OUTPUT_SIZE)

    params = prepare_params(w_ih, b_ih, w_hh, b_hh, w_ho, b_ho)

    out = simple_rnn_forward(x, params)
    out = jax.block_until_ready(out)

    # Reference is full f32; the kernel uses bf16 MXU operands on the
    # recurrence matmul (f32 accumulate), so compare with a loosened tolerance.
    ref = _reference(x, w_ih, b_ih, w_hh, b_hh, w_ho, b_ho)
    assert out.shape == (B, OUTPUT_SIZE)
    assert jnp.allclose(out, ref, atol=3e-2, rtol=3e-2), "mismatch vs reference"
    print("KERNEL_OK")
</pallas_src>

<mosaic_0001>
module attributes {stable_mosaic.version = 11 : i64} {
  func.func @_rnn_kernel(%arg0: memref<64x28xf32, #tpu.memory_space<vmem>>, %arg1: memref<28x128xf32, #tpu.memory_space<vmem>>, %arg2: memref<1x128xf32, #tpu.memory_space<vmem>>, %arg3: memref<128x128xbf16, #tpu.memory_space<vmem>>, %arg4: memref<128x28xf32, #tpu.memory_space<vmem>>, %arg5: memref<1x28xf32, #tpu.memory_space<vmem>>, %arg6: memref<8x28xf32, #tpu.memory_space<vmem>>) attributes {dimension_semantics = [], scalar_prefetch = 0 : i64, scratch_operands = 0 : i64, tpu.core_type = #tpu.core_type<tc>} {
    %c0 = arith.constant 0 : index
    %c0_0 = arith.constant 0 : index
    %0 = vector.load %arg0[%c0, %c0_0] : memref<64x28xf32, #tpu.memory_space<vmem>>, vector<64x28xf32>
    %c0_1 = arith.constant 0 : index
    %c0_2 = arith.constant 0 : index
    %1 = vector.load %arg1[%c0_1, %c0_2] : memref<28x128xf32, #tpu.memory_space<vmem>>, vector<28x128xf32>
    %cst = arith.constant dense<0.000000e+00> : vector<64x128xf32>
    %2 = tpu.matmul %0, %1, %cst {dimension_numbers = #tpu.dot_dimension_numbers<[1], [0], [0], [1], [0, 0, 1, 1], [], []>} : vector<64x28xf32>, vector<28x128xf32>, vector<64x128xf32> -> vector<64x128xf32>
    %c0_3 = arith.constant 0 : index
    %c0_4 = arith.constant 0 : index
    %3 = vector.load %arg2[%c0_3, %c0_4] : memref<1x128xf32, #tpu.memory_space<vmem>>, vector<1x128xf32>
    %4 = vector.broadcast %3 : vector<1x128xf32> to vector<64x128xf32>
    %5 = arith.addf %2, %4 : vector<64x128xf32>
    %c0_5 = arith.constant 0 : index
    %c0_6 = arith.constant 0 : index
    %6 = vector.load %arg3[%c0_5, %c0_6] : memref<128x128xbf16, #tpu.memory_space<vmem>>, vector<128x128xbf16>
    %7 = vector.extract_strided_slice %5 {offsets = [0, 0], sizes = [8, 128], strides = [1, 1]} : vector<64x128xf32> to vector<8x128xf32>
    %8 = math.tanh %7 : vector<8x128xf32>
    %9 = arith.truncf %8 : vector<8x128xf32> to vector<8x128xbf16>
    %cst_7 = arith.constant dense<0.000000e+00> : vector<8x128xf32>
    %10 = tpu.matmul %9, %6, %cst_7 {dimension_numbers = #tpu.dot_dimension_numbers<[1], [0], [0], [1], [0, 0, 1, 1], [], []>} : vector<8x128xbf16>, vector<128x128xbf16>, vector<8x128xf32> -> vector<8x128xf32>
    %11 = vector.extract_strided_slice %5 {offsets = [8, 0], sizes = [8, 128], strides = [1, 1]} : vector<64x128xf32> to vector<8x128xf32>
    %12 = arith.addf %11, %10 : vector<8x128xf32>
    %13 = math.tanh %12 : vector<8x128xf32>
    %14 = arith.truncf %13 : vector<8x128xf32> to vector<8x128xbf16>
    %cst_8 = arith.constant dense<0.000000e+00> : vector<8x128xf32>
    %15 = tpu.matmul %14, %6, %cst_8 {dimension_numbers = #tpu.dot_dimension_numbers<[1], [0], [0], [1], [0, 0, 1, 1], [], []>} : vector<8x128xbf16>, vector<128x128xbf16>, vector<8x128xf32> -> vector<8x128xf32>
    %16 = vector.extract_strided_slice %5 {offsets = [16, 0], sizes = [8, 128], strides = [1, 1]} : vector<64x128xf32> to vector<8x128xf32>
    %17 = arith.addf %16, %15 : vector<8x128xf32>
    %18 = math.tanh %17 : vector<8x128xf32>
    %19 = arith.truncf %18 : vector<8x128xf32> to vector<8x128xbf16>
    %cst_9 = arith.constant dense<0.000000e+00> : vector<8x128xf32>
    %20 = tpu.matmul %19, %6, %cst_9 {dimension_numbers = #tpu.dot_dimension_numbers<[1], [0], [0], [1], [0, 0, 1, 1], [], []>} : vector<8x128xbf16>, vector<128x128xbf16>, vector<8x128xf32> -> vector<8x128xf32>
    %21 = vector.extract_strided_slice %5 {offsets = [24, 0], sizes = [8, 128], strides = [1, 1]} : vector<64x128xf32> to vector<8x128xf32>
    %22 = arith.addf %21, %20 : vector<8x128xf32>
    %23 = math.tanh %22 : vector<8x128xf32>
    %24 = arith.truncf %23 : vector<8x128xf32> to vector<8x128xbf16>
    %cst_10 = arith.constant dense<0.000000e+00> : vector<8x128xf32>
    %25 = tpu.matmul %24, %6, %cst_10 {dimension_numbers = #tpu.dot_dimension_numbers<[1], [0], [0], [1], [0, 0, 1, 1], [], []>} : vector<8x128xbf16>, vector<128x128xbf16>, vector<8x128xf32> -> vector<8x128xf32>
    %26 = vector.extract_strided_slice %5 {offsets = [32, 0], sizes = [8, 128], strides = [1, 1]} : vector<64x128xf32> to vector<8x128xf32>
    %27 = arith.addf %26, %25 : vector<8x128xf32>
    %28 = math.tanh %27 : vector<8x128xf32>
    %29 = arith.truncf %28 : vector<8x128xf32> to vector<8x128xbf16>
    %cst_11 = arith.constant dense<0.000000e+00> : vector<8x128xf32>
    %30 = tpu.matmul %29, %6, %cst_11 {dimension_numbers = #tpu.dot_dimension_numbers<[1], [0], [0], [1], [0, 0, 1, 1], [], []>} : vector<8x128xbf16>, vector<128x128xbf16>, vector<8x128xf32> -> vector<8x128xf32>
    %31 = vector.extract_strided_slice %5 {offsets = [40, 0], sizes = [8, 128], strides = [1, 1]} : vector<64x128xf32> to vector<8x128xf32>
    %32 = arith.addf %31, %30 : vector<8x128xf32>
    %33 = math.tanh %32 : vector<8x128xf32>
    %34 = arith.truncf %33 : vector<8x128xf32> to vector<8x128xbf16>
    %cst_12 = arith.constant dense<0.000000e+00> : vector<8x128xf32>
    %35 = tpu.matmul %34, %6, %cst_12 {dimension_numbers = #tpu.dot_dimension_numbers<[1], [0], [0], [1], [0, 0, 1, 1], [], []>} : vector<8x128xbf16>, vector<128x128xbf16>, vector<8x128xf32> -> vector<8x128xf32>
    %36 = vector.extract_strided_slice %5 {offsets = [48, 0], sizes = [8, 128], strides = [1, 1]} : vector<64x128xf32> to vector<8x128xf32>
    %37 = arith.addf %36, %35 : vector<8x128xf32>
    %38 = math.tanh %37 : vector<8x128xf32>
    %39 = arith.truncf %38 : vector<8x128xf32> to vector<8x128xbf16>
    %cst_13 = arith.constant dense<0.000000e+00> : vector<8x128xf32>
    %40 = tpu.matmul %39, %6, %cst_13 {dimension_numbers = #tpu.dot_dimension_numbers<[1], [0], [0], [1], [0, 0, 1, 1], [], []>} : vector<8x128xbf16>, vector<128x128xbf16>, vector<8x128xf32> -> vector<8x128xf32>
    %41 = vector.extract_strided_slice %5 {offsets = [56, 0], sizes = [8, 128], strides = [1, 1]} : vector<64x128xf32> to vector<8x128xf32>
    %42 = arith.addf %41, %40 : vector<8x128xf32>
    %43 = math.tanh %42 : vector<8x128xf32>
    %c0_14 = arith.constant 0 : index
    %c0_15 = arith.constant 0 : index
    %44 = vector.load %arg4[%c0_14, %c0_15] : memref<128x28xf32, #tpu.memory_space<vmem>>, vector<128x28xf32>
    %cst_16 = arith.constant dense<0.000000e+00> : vector<8x28xf32>
    %45 = tpu.matmul %43, %44, %cst_16 {dimension_numbers = #tpu.dot_dimension_numbers<[1], [0], [0], [1], [0, 0, 1, 1], [], []>} : vector<8x128xf32>, vector<128x28xf32>, vector<8x28xf32> -> vector<8x28xf32>
    %c0_17 = arith.constant 0 : index
    %c0_18 = arith.constant 0 : index
    %46 = vector.load %arg5[%c0_17, %c0_18] : memref<1x28xf32, #tpu.memory_space<vmem>>, vector<1x28xf32>
    %47 = vector.broadcast %46 : vector<1x28xf32> to vector<8x28xf32>
    %48 = arith.addf %45, %47 : vector<8x28xf32>
    %c0_19 = arith.constant 0 : index
    %c0_20 = arith.constant 0 : index
    %49 = vector.load %arg6[%c0_19, %c0_20] : memref<8x28xf32, #tpu.memory_space<vmem>>, vector<8x28xf32>
    tpu.vector_store %arg6[%c0_19, %c0_20], %48 {strides = array<i32>} : memref<8x28xf32, #tpu.memory_space<vmem>>, vector<8x28xf32>,
    return
  }
}

</mosaic_0001>

<llo_original>
// kernel: simple_rnn_forward.1
$region0: #{simple_rnn_forward.1}
  #allocation0 [shape = 'u32[]', space=smem, size = 0x4, offset = 0x4, fixed_abs, tag = 'smem constant byte address 0x4 - core index']
  #allocation1 [shape = 'u32[144,128]{1,0:T(1,128)}', space=vmem, size = 0x12000, scoped, tag = 'internal scratch']
  %s0 = inlined_call_operand.vmem [shape: f32[64,28], index: 0, kind: input, shape index: {}]
  %s1 = inlined_call_operand.vmem [shape: f32[28,128], index: 1, kind: input, shape index: {}]
  %s2 = inlined_call_operand.vmem [shape: f32[1,128], index: 2, kind: input, shape index: {}]
  %s3 = inlined_call_operand.vmem [shape: bf16[128,128], index: 3, kind: input, shape index: {}]
  %s4 = inlined_call_operand.vmem [shape: f32[128,28], index: 4, kind: input, shape index: {}]
  %s5 = inlined_call_operand.vmem [shape: f32[1,28], index: 5, kind: input, shape index: {}]
  %s6 = inlined_call_operand.vmem [shape: f32[8,28], index: 6, kind: output, shape index: {}]
  %s7 = sld [smem:[#allocation0]]
  $region34: #{simple_rnn_forward.1} parent=0
    _
  %s9 = ssub.s32 1, %s7
  %s10 = scalar_select 0, %s9, %s7
  // Predicated region
  $region2: #{simple_rnn_forward.1} parent=0 // pred_check
    _
  $region3: #{simple_rnn_forward.1} parent=0 // pred_check_branch
    %12 = sbr.rel (0) target = $region5
  $region4: #{simple_rnn_forward.1} parent=0 // pred_region
    _
  $region5: #{simple_rnn_forward.1} parent=0 // pred_fallthru
    _
  // Predicated region
  $region6: #{simple_rnn_forward.1} parent=0 // pred_check
    _
  $region7: #{simple_rnn_forward.1} parent=0 // pred_check_branch
    %14 = sbr.rel (0) target = $region9
  $region8: #{simple_rnn_forward.1} parent=0 // pred_region
    _
  $region9: #{simple_rnn_forward.1} parent=0 // pred_fallthru
    _
  // Predicated region
  $region10: #{simple_rnn_forward.1} parent=0 // pred_check
    _
  $region11: #{simple_rnn_forward.1} parent=0 // pred_check_branch
    %16 = sbr.rel (0) target = $region13
  $region12: #{simple_rnn_forward.1} parent=0 // pred_region
    _
  $region13: #{simple_rnn_forward.1} parent=0 // pred_fallthru
    _
  // Predicated region
  $region14: #{simple_rnn_forward.1} parent=0 // pred_check
    _
  $region15: #{simple_rnn_forward.1} parent=0 // pred_check_branch
    %18 = sbr.rel (0) target = $region17
  $region16: #{simple_rnn_forward.1} parent=0 // pred_region
    _
  $region17: #{simple_rnn_forward.1} parent=0 // pred_fallthru
    _
  // Predicated region
  $region18: #{simple_rnn_forward.1} parent=0 // pred_check
    _
  $region19: #{simple_rnn_forward.1} parent=0 // pred_check_branch
    %20 = sbr.rel (0) target = $region21
  $region20: #{simple_rnn_forward.1} parent=0 // pred_region
    _
  $region21: #{simple_rnn_forward.1} parent=0 // pred_fallthru
    _
  // Predicated region
  $region22: #{simple_rnn_forward.1} parent=0 // pred_check
    _
  $region23: #{simple_rnn_forward.1} parent=0 // pred_check_branch
    %22 = sbr.rel (0) target = $region25
  $region24: #{simple_rnn_forward.1} parent=0 // pred_region
    _
  $region25: #{simple_rnn_forward.1} parent=0 // pred_fallthru
    _
  %v24 = vld [vmem:[%s0] sm:$0xff]
  %v25 = vld [vmem:[%s0 + $0x8] sm:$0xff]
  %v26 = vld [vmem:[%s0 + $0x10] sm:$0xff]
  %v27 = vld [vmem:[%s0 + $0x18] sm:$0xff]
  %v28 = vld [vmem:[%s0 + $0x20] sm:$0xff]
  %v29 = vld [vmem:[%s0 + $0x28] sm:$0xff]
  %v30 = vld [vmem:[%s0 + $0x30] sm:$0xff]
  %v31 = vld [vmem:[%s0 + $0x38] sm:$0xff]
  %v32 = vld [vmem:[%s1] sm:$0xff]
  %v33 = vld [vmem:[%s1 + $0x8] sm:$0xff]
  %v34 = vld [vmem:[%s1 + $0x10] sm:$0xff]
  %v35 = vld [vmem:[%s1 + $0x18] sm:$0xf]
  %v36 = vld [vmem:[%s2] sm:$0x1]
  %v38 = vlaneseq
  %v39 = vshrl.u32 %v38, 7
  %v40 = vsub.s32 0, %v39
  %v41 = vrot.slane %v36, %v40
  %vm43 = vcmask 228352
  %v45 = vsel %vm43, %v24, 0
  %v48 = vsel %vm43, %v25, 0
  %v51 = vsel %vm43, %v26, 0
  %v54 = vsel %vm43, %v27, 0
  %v57 = vsel %vm43, %v28, 0
  %v60 = vsel %vm43, %v29, 0
  %v63 = vsel %vm43, %v30, 0
  %v66 = vsel %vm43, %v31, 0
  %vm68 = vcmask 1043456
  %v70 = vsel %vm68, %v35, 0
  %72 = vmatprep.subr.mxu0 0.0
  %73 = vmatpush1.msra.mxu0 %v32
  %74 = vmatprep.subr.mxu0 0.0
  %75 = vmatpush1.msra.mxu0 %v33
  %76 = vmatprep.subr.mxu0 0.0
  %77 = vmatpush1.msra.mxu0 %v34
  %78 = vmatprep.subr.mxu0 0.0
  %79 = vmatpush1.msra.mxu0 %v70
  %80 = vmatprep.subr.mxu0 0.0
  %81 = vmatpush1.msra.mxu0 0.0
  %82 = vmatprep.subr.mxu0 0.0
  %83 = vmatpush1.msra.mxu0 0.0
  %84 = vmatprep.subr.mxu0 0.0
  %85 = vmatpush1.msra.mxu0 0.0
  %86 = vmatprep.subr.mxu0 0.0
  %87 = vmatpush1.msra.mxu0 0.0
  %88 = vmatprep.subr.mxu0 0.0
  %89 = vmatpush1.msra.mxu0 0.0
  %90 = vmatprep.subr.mxu0 0.0
  %91 = vmatpush1.msra.mxu0 0.0
  %92 = vmatprep.subr.mxu0 0.0
  %93 = vmatpush1.msra.mxu0 0.0
  %94 = vmatprep.subr.mxu0 0.0
  %95 = vmatpush1.msra.mxu0 0.0
  %96 = vmatprep.subr.mxu0 0.0
  %97 = vmatpush1.msra.mxu0 0.0
  %98 = vmatprep.subr.mxu0 0.0
  %99 = vmatpush1.msra.mxu0 0.0
  %100 = vmatprep.subr.mxu0 0.0
  %101 = vmatpush1.msra.mxu0 0.0
  %102 = vmatprep.subr.mxu0 0.0
  %103 = vmatpush1.msra.mxu0 0.0
  %104 = vmatprep.subr.mxu0 0.0
  %105 = vmatpush1.msra.mxu0 0.0
  %106 = vmatprep.subr.mxu0 0.0
  %107 = vmatpush1.msra.mxu0 0.0
  %108 = vmatprep.subr.mxu0 0.0
  %109 = vmatpush1.msra.mxu0 0.0
  %110 = vmatprep.subr.mxu0 0.0
  %111 = vmatpush1.msra.mxu0 0.0
  %112 = vmatprep.subr.mxu0 0.0
  %113 = vmatpush1.msra.mxu0 0.0
  %114 = vmatprep.subr.mxu0 0.0
  %115 = vmatpush1.msra.mxu0 0.0
  %116 = vmatprep.subr.mxu0 0.0
  %117 = vmatpush1.msra.mxu0 0.0
  %118 = vmatprep.subr.mxu0 0.0
  %119 = vmatpush1.msra.mxu0 0.0
  %120 = vmatprep.subr.mxu0 0.0
  %121 = vmatpush1.msra.mxu0 0.0
  %122 = vmatprep.subr.mxu0 0.0
  %123 = vmatpush1.msra.mxu0 0.0
  %124 = vmatprep.subr.mxu0 0.0
  %125 = vmatpush1.msra.mxu0 0.0
  %126 = vmatprep.subr.mxu0 0.0
  %127 = vmatpush1.msra.mxu0 0.0
  %128 = vmatprep.subr.mxu0 0.0
  %129 = vmatpush1.msra.mxu0 0.0
  %130 = vmatprep.subr.mxu0 0.0
  %131 = vmatpush1.msra.mxu0 0.0
  %132 = vmatprep.subr.mxu0 0.0
  %133 = vmatpush1.msra.mxu0 0.0
  %134 = vmatprep.subr.mxu0 0.0
  %135 = vmatpush1.msra.mxu0 0.0
  %136 = vmatprep.mubr.f32.mxu0 0.0
  %137 = vmatmul.mubr.f32.gmra.mrb[0].mxu0 %v45
  %v138 = vpop.f32.mrb[0].mxu0
  %v139 = vadd.f32 %v41, %v138
  %v140 = vpop.f32.mrb[0].mxu0
  %141 = vmatprep.mubr.f32.mxu0 0.0
  %142 = vmatmul.mubr.f32.gmra.mrb[0].mxu0 %v48
  %v143 = vpop.f32.mrb[0].mxu0
  %v144 = vadd.f32 %v41, %v143
  %v145 = vpop.f32.mrb[0].mxu0
  %146 = vmatprep.mubr.f32.mxu0 0.0
  %147 = vmatmul.mubr.f32.gmra.mrb[0].mxu0 %v51
  %v148 = vpop.f32.mrb[0].mxu0
  %v149 = vadd.f32 %v41, %v148
  %v150 = vpop.f32.mrb[0].mxu0
  %151 = vmatprep.mubr.f32.mxu0 0.0
  %152 = vmatmul.mubr.f32.gmra.mrb[0].mxu0 %v54
  %v153 = vpop.f32.mrb[0].mxu0
  %v154 = vadd.f32 %v41, %v153
  %v155 = vpop.f32.mrb[0].mxu0
  %156 = vmatprep.mubr.f32.mxu0 0.0
  %157 = vmatmul.mubr.f32.gmra.mrb[0].mxu0 %v57
  %v158 = vpop.f32.mrb[0].mxu0
  %v159 = vadd.f32 %v41, %v158
  %v160 = vpop.f32.mrb[0].mxu0
  %161 = vmatprep.mubr.f32.mxu0 0.0
  %162 = vmatmul.mubr.f32.gmra.mrb[0].mxu0 %v60
  %v163 = vpop.f32.mrb[0].mxu0
  %v164 = vadd.f32 %v41, %v163
  %v165 = vpop.f32.mrb[0].mxu0
  %166 = vmatprep.mubr.f32.mxu0 0.0
  %167 = vmatmul.mubr.f32.gmra.mrb[0].mxu0 %v63
  %v168 = vpop.f32.mrb[0].mxu0
  %v169 = vadd.f32 %v41, %v168
  %v170 = vpop.f32.mrb[0].mxu0
  %171 = vmatprep.mubr.f32.mxu0 0.0
  %172 = vmatmul.mubr.f32.gmra.mrb[0].mxu0 %v66
  %v173 = vpop.f32.mrb[0].mxu0
  %v174 = vadd.f32 %v41, %v173
  %v175 = vpop.f32.mrb[0].mxu0
  %176 = vdwg.mxu0
  %v177 = vld [vmem:[%s3] sm:$0xf]
  %v178 = vld [vmem:[%s3 + $0x4] sm:$0xf]
  %v179 = vld [vmem:[%s3 + $0x8] sm:$0xf]
  %v180 = vld [vmem:[%s3 + $0xc] sm:$0xf]
  %v181 = vld [vmem:[%s3 + $0x10] sm:$0xf]
  %v182 = vld [vmem:[%s3 + $0x14] sm:$0xf]
  %v183 = vld [vmem:[%s3 + $0x18] sm:$0xf]
  %v184 = vld [vmem:[%s3 + $0x1c] sm:$0xf]
  %v185 = vld [vmem:[%s3 + $0x20] sm:$0xf]
  %v186 = vld [vmem:[%s3 + $0x24] sm:$0xf]
  %v187 = vld [vmem:[%s3 + $0x28] sm:$0xf]
  %v188 = vld [vmem:[%s3 + $0x2c] sm:$0xf]
  %v189 = vld [vmem:[%s3 + $0x30] sm:$0xf]
  %v190 = vld [vmem:[%s3 + $0x34] sm:$0xf]
  %v191 = vld [vmem:[%s3 + $0x38] sm:$0xf]
  %v192 = vld [vmem:[%s3 + $0x3c] sm:$0xf]
  %v193 = vtanh.pop %v139
  %v194 = vpack.c.bf16 %v193, %v193
  %v211 = vunpack.c.l.b16 %v177
  %v212 = vunpack.c.l.b16 %v178
  %v213 = vunpack.c.l.b16 %v179
  %v214 = vunpack.c.l.b16 %v180
  %v215 = vunpack.c.l.b16 %v181
  %v216 = vunpack.c.l.b16 %v182
  %v217 = vunpack.c.l.b16 %v183
  %v218 = vunpack.c.l.b16 %v184
  %v219 = vunpack.c.l.b16 %v185
  %v220 = vunpack.c.l.b16 %v186
  %v221 = vunpack.c.l.b16 %v187
  %v222 = vunpack.c.l.b16 %v188
  %v223 = vunpack.c.l.b16 %v189
  %v224 = vunpack.c.l.b16 %v190
  %v225 = vunpack.c.l.b16 %v191
  %v226 = vunpack.c.l.b16 %v192
  %v227 = vpack.c.b16 %v212, %v211
  %v228 = vpack.c.b16 %v214, %v213
  %v229 = vpack.c.b16 %v216, %v215
  %v230 = vpack.c.b16 %v218, %v217
  %v231 = vpack.c.b16 %v220, %v219
  %v232 = vpack.c.b16 %v222, %v221
  %v233 = vpack.c.b16 %v224, %v223
  %v234 = vpack.c.b16 %v226, %v225
  %243 = vmatprep.subr.bf16.mxu0 0
  %244 = vmatpush1.bf16.msra.mxu0 %v227
  %245 = vmatprep.subr.bf16.mxu0 0
  %246 = vmatpush1.bf16.msra.mxu0 %v228
  %247 = vmatprep.subr.bf16.mxu0 0
  %248 = vmatpush1.bf16.msra.mxu0 %v229
  %249 = vmatprep.subr.bf16.mxu0 0
  %250 = vmatpush1.bf16.msra.mxu0 %v230
  %251 = vmatprep.subr.bf16.mxu0 0
  %252 = vmatpush1.bf16.msra.mxu0 %v231
  %253 = vmatprep.subr.bf16.mxu0 0
  %254 = vmatpush1.bf16.msra.mxu0 %v232
  %255 = vmatprep.subr.bf16.mxu0 0
  %256 = vmatpush1.bf16.msra.mxu0 %v233
  %257 = vmatprep.subr.bf16.mxu0 0
  %258 = vmatpush1.bf16.msra.mxu0 %v234
  %259 = vmatprep.subr.bf16.mxu0 0
  %260 = vmatpush1.bf16.msra.mxu0 0
  %261 = vmatprep.subr.bf16.mxu0 0
  %262 = vmatpush1.bf16.msra.mxu0 0
  %263 = vmatprep.subr.bf16.mxu0 0
  %264 = vmatpush1.bf16.msra.mxu0 0
  %265 = vmatprep.subr.bf16.mxu0 0
  %266 = vmatpush1.bf16.msra.mxu0 0
  %267 = vmatprep.subr.bf16.mxu0 0
  %268 = vmatpush1.bf16.msra.mxu0 0
  %269 = vmatprep.subr.bf16.mxu0 0
  %270 = vmatpush1.bf16.msra.mxu0 0
  %271 = vmatprep.subr.bf16.mxu0 0
  %272 = vmatpush1.bf16.msra.mxu0 0
  %273 = vmatprep.subr.bf16.mxu0 0
  %274 = vmatpush1.bf16.msra.mxu0 0
  %275 = vmatprep.mubr.bf16.mxu0 0
  %276 = vmatmul.mubr.bf16.gmra.mrb[0].mxu0 %v194
  %v277 = vpop.f32.mrb[0].mxu0
  %v278 = vadd.f32 0.0, %v277
  %v279 = vpop.f32.mrb[0].mxu0
  %v280 = vpop.f32.mrb[0].mxu0
  %v281 = vpop.f32.mrb[0].mxu0
  %282 = vdwg.mxu0
  %v283 = vadd.f32 %v144, %v278
  %v284 = vtanh.pop %v283
  %v285 = vpack.c.bf16 %v284, %v284
  %286 = vmatprep.subr.bf16.mxu0 0
  %287 = vmatpush1.bf16.msra.mxu0 %v227
  %288 = vmatprep.subr.bf16.mxu0 0
  %289 = vmatpush1.bf16.msra.mxu0 %v228
  %290 = vmatprep.subr.bf16.mxu0 0
  %291 = vmatpush1.bf16.msra.mxu0 %v229
  %292 = vmatprep.subr.bf16.mxu0 0
  %293 = vmatpush1.bf16.msra.mxu0 %v230
  %294 = vmatprep.subr.bf16.mxu0 0
  %295 = vmatpush1.bf16.msra.mxu0 %v231
  %296 = vmatprep.subr.bf16.mxu0 0
  %297 = vmatpush1.bf16.msra.mxu0 %v232
  %298 = vmatprep.subr.bf16.mxu0 0
  %299 = vmatpush1.bf16.msra.mxu0 %v233
  %300 = vmatprep.subr.bf16.mxu0 0
  %301 = vmatpush1.bf16.msra.mxu0 %v234
  %302 = vmatprep.subr.bf16.mxu0 0
  %303 = vmatpush1.bf16.msra.mxu0 0
  %304 = vmatprep.subr.bf16.mxu0 0
  %305 = vmatpush1.bf16.msra.mxu0 0
  %306 = vmatprep.subr.bf16.mxu0 0
  %307 = vmatpush1.bf16.msra.mxu0 0
  %308 = vmatprep.subr.bf16.mxu0 0
  %309 = vmatpush1.bf16.msra.mxu0 0
  %310 = vmatprep.subr.bf16.mxu0 0
  %311 = vmatpush1.bf16.msra.mxu0 0
  %312 = vmatprep.subr.bf16.mxu0 0
  %313 = vmatpush1.bf16.msra.mxu0 0
  %314 = vmatprep.subr.bf16.mxu0 0
  %315 = vmatpush1.bf16.msra.mxu0 0
  %316 = vmatprep.subr.bf16.mxu0 0
  %317 = vmatpush1.bf16.msra.mxu0 0
  %318 = vmatprep.mubr.bf16.mxu0 0
  %319 = vmatmul.mubr.bf16.gmra.mrb[0].mxu0 %v285
  %v320 = vpop.f32.mrb[0].mxu0
  %v321 = vadd.f32 0.0, %v320
  %v322 = vpop.f32.mrb[0].mxu0
  %v323 = vpop.f32.mrb[0].mxu0
  %v324 = vpop.f32.mrb[0].mxu0
  %325 = vdwg.mxu0
  %v326 = vadd.f32 %v149, %v321
  %v327 = vtanh.pop %v326
  %v328 = vpack.c.bf16 %v327, %v327
  %329 = vmatprep.subr.bf16.mxu0 0
  %330 = vmatpush1.bf16.msra.mxu0 %v227
  %331 = vmatprep.subr.bf16.mxu0 0
  %332 = vmatpush1.bf16.msra.mxu0 %v228
  %333 = vmatprep.subr.bf16.mxu0 0
  %334 = vmatpush1.bf16.msra.mxu0 %v229
  %335 = vmatprep.subr.bf16.mxu0 0
  %336 = vmatpush1.bf16.msra.mxu0 %v230
  %337 = vmatprep.subr.bf16.mxu0 0
  %338 = vmatpush1.bf16.msra.mxu0 %v231
  %339 = vmatprep.subr.bf16.mxu0 0
  %340 = vmatpush1.bf16.msra.mxu0 %v232
  %341 = vmatprep.subr.bf16.mxu0 0
  %342 = vmatpush1.bf16.msra.mxu0 %v233
  %343 = vmatprep.subr.bf16.mxu0 0
  %344 = vmatpush1.bf16.msra.mxu0 %v234
  %345 = vmatprep.subr.bf16.mxu0 0
  %346 = vmatpush1.bf16.msra.mxu0 0
  %347 = vmatprep.subr.bf16.mxu0 0
  %348 = vmatpush1.bf16.msra.mxu0 0
  %349 = vmatprep.subr.bf16.mxu0 0
  %350 = vmatpush1.bf16.msra.mxu0 0
  %351 = vmatprep.subr.bf16.mxu0 0
  %352 = vmatpush1.bf16.msra.mxu0 0
  %353 = vmatprep.subr.bf16.mxu0 0
  %354 = vmatpush1.bf16.msra.mxu0 0
  %355 = vmatprep.subr.bf16.mxu0 0
  %356 = vmatpush1.bf16.msra.mxu0 0
  %357 = vmatprep.subr.bf16.mxu0 0
  %358 = vmatpush1.bf16.msra.mxu0 0
  %359 = vmatprep.subr.bf16.mxu0 0
  %360 = vmatpush1.bf16.msra.mxu0 0
  %361 = vmatprep.mubr.bf16.mxu0 0
  %362 = vmatmul.mubr.bf16.gmra.mrb[0].mxu0 %v328
  %v363 = vpop.f32.mrb[0].mxu0
  %v364 = vadd.f32 0.0, %v363
  %v365 = vpop.f32.mrb[0].mxu0
  %v366 = vpop.f32.mrb[0].mxu0
  %v367 = vpop.f32.mrb[0].mxu0
  %368 = vdwg.mxu0
  %v369 = vadd.f32 %v154, %v364
  %v370 = vtanh.pop %v369
  %v371 = vpack.c.bf16 %v370, %v370
  %372 = vmatprep.subr.bf16.mxu0 0
  %373 = vmatpush1.bf16.msra.mxu0 %v227
  %374 = vmatprep.subr.bf16.mxu0 0
  %375 = vmatpush1.bf16.msra.mxu0 %v228
  %376 = vmatprep.subr.bf16.mxu0 0
  %377 = vmatpush1.bf16.msra.mxu0 %v229
  %378 = vmatprep.subr.bf16.mxu0 0
  %379 = vmatpush1.bf16.msra.mxu0 %v230
  %380 = vmatprep.subr.bf16.mxu0 0
  %381 = vmatpush1.bf16.msra.mxu0 %v231
  %382 = vmatprep.subr.bf16.mxu0 0
  %383 = vmatpush1.bf16.msra.mxu0 %v232
  %384 = vmatprep.subr.bf16.mxu0 0
  %385 = vmatpush1.bf16.msra.mxu0 %v233
  %386 = vmatprep.subr.bf16.mxu0 0
  %387 = vmatpush1.bf16.msra.mxu0 %v234
  %388 = vmatprep.subr.bf16.mxu0 0
  %389 = vmatpush1.bf16.msra.mxu0 0
  %390 = vmatprep.subr.bf16.mxu0 0
  %391 = vmatpush1.bf16.msra.mxu0 0
  %392 = vmatprep.subr.bf16.mxu0 0
  %393 = vmatpush1.bf16.msra.mxu0 0
  %394 = vmatprep.subr.bf16.mxu0 0
  %395 = vmatpush1.bf16.msra.mxu0 0
  %396 = vmatprep.subr.bf16.mxu0 0
  %397 = vmatpush1.bf16.msra.mxu0 0
  %398 = vmatprep.subr.bf16.mxu0 0
  %399 = vmatpush1.bf16.msra.mxu0 0
  %400 = vmatprep.subr.bf16.mxu0 0
  %401 = vmatpush1.bf16.msra.mxu0 0
  %402 = vmatprep.subr.bf16.mxu0 0
  %403 = vmatpush1.bf16.msra.mxu0 0
  %404 = vmatprep.mubr.bf16.mxu0 0
  %405 = vmatmul.mubr.bf16.gmra.mrb[0].mxu0 %v371
  %v406 = vpop.f32.mrb[0].mxu0
  %v407 = vadd.f32 0.0, %v406
  %v408 = vpop.f32.mrb[0].mxu0
  %v409 = vpop.f32.mrb[0].mxu0
  %v410 = vpop.f32.mrb[0].mxu0
  %411 = vdwg.mxu0
  %v412 = vadd.f32 %v159, %v407
  %v413 = vtanh.pop %v412
  %v414 = vpack.c.bf16 %v413, %v413
  %415 = vmatprep.subr.bf16.mxu0 0
  %416 = vmatpush1.bf16.msra.mxu0 %v227
  %417 = vmatprep.subr.bf16.mxu0 0
  %418 = vmatpush1.bf16.msra.mxu0 %v228
  %419 = vmatprep.subr.bf16.mxu0 0
  %420 = vmatpush1.bf16.msra.mxu0 %v229
  %421 = vmatprep.subr.bf16.mxu0 0
  %422 = vmatpush1.bf16.msra.mxu0 %v230
  %423 = vmatprep.subr.bf16.mxu0 0
  %424 = vmatpush1.bf16.msra.mxu0 %v231
  %425 = vmatprep.subr.bf16.mxu0 0
  %426 = vmatpush1.bf16.msra.mxu0 %v232
  %427 = vmatprep.subr.bf16.mxu0 0
  %428 = vmatpush1.bf16.msra.mxu0 %v233
  %429 = vmatprep.subr.bf16.mxu0 0
  %430 = vmatpush1.bf16.msra.mxu0 %v234
  %431 = vmatprep.subr.bf16.mxu0 0
  %432 = vmatpush1.bf16.msra.mxu0 0
  %433 = vmatprep.subr.bf16.mxu0 0
  %434 = vmatpush1.bf16.msra.mxu0 0
  %435 = vmatprep.subr.bf16.mxu0 0
  %436 = vmatpush1.bf16.msra.mxu0 0
  %437 = vmatprep.subr.bf16.mxu0 0
  %438 = vmatpush1.bf16.msra.mxu0 0
  %439 = vmatprep.subr.bf16.mxu0 0
  %440 = vmatpush1.bf16.msra.mxu0 0
  %441 = vmatprep.subr.bf16.mxu0 0
  %442 = vmatpush1.bf16.msra.mxu0 0
  %443 = vmatprep.subr.bf16.mxu0 0
  %444 = vmatpush1.bf16.msra.mxu0 0
  %445 = vmatprep.subr.bf16.mxu0 0
  %446 = vmatpush1.bf16.msra.mxu0 0
  %447 = vmatprep.mubr.bf16.mxu0 0
  %448 = vmatmul.mubr.bf16.gmra.mrb[0].mxu0 %v414
  %v449 = vpop.f32.mrb[0].mxu0
  %v450 = vadd.f32 0.0, %v449
  %v451 = vpop.f32.mrb[0].mxu0
  %v452 = vpop.f32.mrb[0].mxu0
  %v453 = vpop.f32.mrb[0].mxu0
  %454 = vdwg.mxu0
  %v455 = vadd.f32 %v164, %v450
  %v456 = vtanh.pop %v455
  %v457 = vpack.c.bf16 %v456, %v456
  %458 = vmatprep.subr.bf16.mxu0 0
  %459 = vmatpush1.bf16.msra.mxu0 %v227
  %460 = vmatprep.subr.bf16.mxu0 0
  %461 = vmatpush1.bf16.msra.mxu0 %v228
  %462 = vmatprep.subr.bf16.mxu0 0
  %463 = vmatpush1.bf16.msra.mxu0 %v229
  %464 = vmatprep.subr.bf16.mxu0 0
  %465 = vmatpush1.bf16.msra.mxu0 %v230
  %466 = vmatprep.subr.bf16.mxu0 0
  %467 = vmatpush1.bf16.msra.mxu0 %v231
  %468 = vmatprep.subr.bf16.mxu0 0
  %469 = vmatpush1.bf16.msra.mxu0 %v232
  %470 = vmatprep.subr.bf16.mxu0 0
  %471 = vmatpush1.bf16.msra.mxu0 %v233
  %472 = vmatprep.subr.bf16.mxu0 0
  %473 = vmatpush1.bf16.msra.mxu0 %v234
  %474 = vmatprep.subr.bf16.mxu0 0
  %475 = vmatpush1.bf16.msra.mxu0 0
  %476 = vmatprep.subr.bf16.mxu0 0
  %477 = vmatpush1.bf16.msra.mxu0 0
  %478 = vmatprep.subr.bf16.mxu0 0
  %479 = vmatpush1.bf16.msra.mxu0 0
  %480 = vmatprep.subr.bf16.mxu0 0
  %481 = vmatpush1.bf16.msra.mxu0 0
  %482 = vmatprep.subr.bf16.mxu0 0
  %483 = vmatpush1.bf16.msra.mxu0 0
  %484 = vmatprep.subr.bf16.mxu0 0
  %485 = vmatpush1.bf16.msra.mxu0 0
  %486 = vmatprep.subr.bf16.mxu0 0
  %487 = vmatpush1.bf16.msra.mxu0 0
  %488 = vmatprep.subr.bf16.mxu0 0
  %489 = vmatpush1.bf16.msra.mxu0 0
  %490 = vmatprep.mubr.bf16.mxu0 0
  %491 = vmatmul.mubr.bf16.gmra.mrb[0].mxu0 %v457
  %v492 = vpop.f32.mrb[0].mxu0
  %v493 = vadd.f32 0.0, %v492
  %v494 = vpop.f32.mrb[0].mxu0
  %v495 = vpop.f32.mrb[0].mxu0
  %v496 = vpop.f32.mrb[0].mxu0
  %497 = vdwg.mxu0
  %v498 = vadd.f32 %v169, %v493
  %v499 = vtanh.pop %v498
  %v500 = vpack.c.bf16 %v499, %v499
  %501 = vmatprep.subr.bf16.mxu0 0
  %502 = vmatpush1.bf16.msra.mxu0 %v227
  %503 = vmatprep.subr.bf16.mxu0 0
  %504 = vmatpush1.bf16.msra.mxu0 %v228
  %505 = vmatprep.subr.bf16.mxu0 0
  %506 = vmatpush1.bf16.msra.mxu0 %v229
  %507 = vmatprep.subr.bf16.mxu0 0
  %508 = vmatpush1.bf16.msra.mxu0 %v230
  %509 = vmatprep.subr.bf16.mxu0 0
  %510 = vmatpush1.bf16.msra.mxu0 %v231
  %511 = vmatprep.subr.bf16.mxu0 0
  %512 = vmatpush1.bf16.msra.mxu0 %v232
  %513 = vmatprep.subr.bf16.mxu0 0
  %514 = vmatpush1.bf16.msra.mxu0 %v233
  %515 = vmatprep.subr.bf16.mxu0 0
  %516 = vmatpush1.bf16.msra.mxu0 %v234
  %517 = vmatprep.subr.bf16.mxu0 0
  %518 = vmatpush1.bf16.msra.mxu0 0
  %519 = vmatprep.subr.bf16.mxu0 0
  %520 = vmatpush1.bf16.msra.mxu0 0
  %521 = vmatprep.subr.bf16.mxu0 0
  %522 = vmatpush1.bf16.msra.mxu0 0
  %523 = vmatprep.subr.bf16.mxu0 0
  %524 = vmatpush1.bf16.msra.mxu0 0
  %525 = vmatprep.subr.bf16.mxu0 0
  %526 = vmatpush1.bf16.msra.mxu0 0
  %527 = vmatprep.subr.bf16.mxu0 0
  %528 = vmatpush1.bf16.msra.mxu0 0
  %529 = vmatprep.subr.bf16.mxu0 0
  %530 = vmatpush1.bf16.msra.mxu0 0
  %531 = vmatprep.subr.bf16.mxu0 0
  %532 = vmatpush1.bf16.msra.mxu0 0
  %533 = vmatprep.mubr.bf16.mxu0 0
  %534 = vmatmul.mubr.bf16.gmra.mrb[0].mxu0 %v500
  %v535 = vpop.f32.mrb[0].mxu0
  %v536 = vadd.f32 0.0, %v535
  %v537 = vpop.f32.mrb[0].mxu0
  %v538 = vpop.f32.mrb[0].mxu0
  %v539 = vpop.f32.mrb[0].mxu0
  %540 = vdwg.mxu0
  %v541 = vadd.f32 %v174, %v536
  %v542 = vtanh.pop %v541
  %v543 = vld [vmem:[%s4] sm:$0xff]
  %v544 = vld [vmem:[%s4 + $0x8] sm:$0xff]
  %v545 = vld [vmem:[%s4 + $0x10] sm:$0xff]
  %v546 = vld [vmem:[%s4 + $0x18] sm:$0xff]
  %v547 = vld [vmem:[%s4 + $0x20] sm:$0xff]
  %v548 = vld [vmem:[%s4 + $0x28] sm:$0xff]
  %v549 = vld [vmem:[%s4 + $0x30] sm:$0xff]
  %v550 = vld [vmem:[%s4 + $0x38] sm:$0xff]
  %v551 = vld [vmem:[%s4 + $0x40] sm:$0xff]
  %v552 = vld [vmem:[%s4 + $0x48] sm:$0xff]
  %v553 = vld [vmem:[%s4 + $0x50] sm:$0xff]
  %v554 = vld [vmem:[%s4 + $0x58] sm:$0xff]
  %v555 = vld [vmem:[%s4 + $0x60] sm:$0xff]
  %v556 = vld [vmem:[%s4 + $0x68] sm:$0xff]
  %v557 = vld [vmem:[%s4 + $0x70] sm:$0xff]
  %v558 = vld [vmem:[%s4 + $0x78] sm:$0xff]
  %v559 = vld [vmem:[%s5] sm:$0x1]
  %v561 = vlaneseq
  %v562 = vshrl.u32 %v561, 7
  %v563 = vsub.s32 0, %v562
  %v564 = vrot.slane %v559, %v563
  %566 = vmatprep.subr.mxu0 0.0
  %567 = vmatpush1.msra.mxu0 %v543
  %568 = vmatprep.subr.mxu0 0.0
  %569 = vmatpush1.msra.mxu0 %v544
  %570 = vmatprep.subr.mxu0 0.0
  %571 = vmatpush1.msra.mxu0 %v545
  %572 = vmatprep.subr.mxu0 0.0
  %573 = vmatpush1.msra.mxu0 %v546
  %574 = vmatprep.subr.mxu0 0.0
  %575 = vmatpush1.msra.mxu0 %v547
  %576 = vmatprep.subr.mxu0 0.0
  %577 = vmatpush1.msra.mxu0 %v548
  %578 = vmatprep.subr.mxu0 0.0
  %579 = vmatpush1.msra.mxu0 %v549
  %580 = vmatprep.subr.mxu0 0.0
  %581 = vmatpush1.msra.mxu0 %v550
  %582 = vmatprep.subr.mxu0 0.0
  %583 = vmatpush1.msra.mxu0 %v551
  %584 = vmatprep.subr.mxu0 0.0
  %585 = vmatpush1.msra.mxu0 %v552
  %586 = vmatprep.subr.mxu0 0.0
  %587 = vmatpush1.msra.mxu0 %v553
  %588 = vmatprep.subr.mxu0 0.0
  %589 = vmatpush1.msra.mxu0 %v554
  %590 = vmatprep.subr.mxu0 0.0
  %591 = vmatpush1.msra.mxu0 %v555
  %592 = vmatprep.subr.mxu0 0.0
  %593 = vmatpush1.msra.mxu0 %v556
  %594 = vmatprep.subr.mxu0 0.0
  %595 = vmatpush1.msra.mxu0 %v557
  %596 = vmatprep.subr.mxu0 0.0
  %597 = vmatpush1.msra.mxu0 %v558
  %598 = vmatprep.subr.mxu0 0.0
  %599 = vmatpush1.msra.mxu0 0.0
  %600 = vmatprep.subr.mxu0 0.0
  %601 = vmatpush1.msra.mxu0 0.0
  %602 = vmatprep.subr.mxu0 0.0
  %603 = vmatpush1.msra.mxu0 0.0
  %604 = vmatprep.subr.mxu0 0.0
  %605 = vmatpush1.msra.mxu0 0.0
  %606 = vmatprep.subr.mxu0 0.0
  %607 = vmatpush1.msra.mxu0 0.0
  %608 = vmatprep.subr.mxu0 0.0
  %609 = vmatpush1.msra.mxu0 0.0
  %610 = vmatprep.subr.mxu0 0.0
  %611 = vmatpush1.msra.mxu0 0.0
  %612 = vmatprep.subr.mxu0 0.0
  %613 = vmatpush1.msra.mxu0 0.0
  %614 = vmatprep.subr.mxu0 0.0
  %615 = vmatpush1.msra.mxu0 0.0
  %616 = vmatprep.subr.mxu0 0.0
  %617 = vmatpush1.msra.mxu0 0.0
  %618 = vmatprep.subr.mxu0 0.0
  %619 = vmatpush1.msra.mxu0 0.0
  %620 = vmatprep.subr.mxu0 0.0
  %621 = vmatpush1.msra.mxu0 0.0
  %622 = vmatprep.subr.mxu0 0.0
  %623 = vmatpush1.msra.mxu0 0.0
  %624 = vmatprep.subr.mxu0 0.0
  %625 = vmatpush1.msra.mxu0 0.0
  %626 = vmatprep.subr.mxu0 0.0
  %627 = vmatpush1.msra.mxu0 0.0
  %628 = vmatprep.subr.mxu0 0.0
  %629 = vmatpush1.msra.mxu0 0.0
  %630 = vmatprep.mubr.f32.mxu0 0.0
  %631 = vmatmul.mubr.f32.gmra.mrb[0].mxu0 %v542
  %v632 = vpop.f32.mrb[0].mxu0
  %v633 = vadd.f32 %v564, %v632
  %v634 = vpop.f32.mrb[0].mxu0
  %635 = vdwg.mxu0
  %636 = vst.msk [vmem:[%s6] sm:$0xff] %vm43, %v633
  // Predicated region
  $region26: #{simple_rnn_forward.1} parent=0 // pred_check
    _
  $region27: #{simple_rnn_forward.1} parent=0 // pred_check_branch
    %638 = sbr.rel (0) target = $region29
  $region28: #{simple_rnn_forward.1} parent=0 // pred_region
    _
  $region29: #{simple_rnn_forward.1} parent=0 // pred_fallthru
    _
  // Predicated region
  $region30: #{simple_rnn_forward.1} parent=0 // pred_check
    _
  $region31: #{simple_rnn_forward.1} parent=0 // pred_check_branch
    %640 = sbr.rel (0) target = $region33
  $region32: #{simple_rnn_forward.1} parent=0 // pred_region
    _
  $region33: #{simple_rnn_forward.1} parent=0 // pred_fallthru
    _

</llo_original>
